<compile_context>
chip_gen: v5e
topology: v5e:2x2
jax: 0.10.0
libtpu: 0.0.40
codegen_flags: <defaults>
</compile_context>

<pallas_src>
import math

import jax
import jax.numpy as jnp
from jax.experimental import pallas as pl
from jax.experimental.pallas import tpu as pltpu


_GELU_C = math.sqrt(2.0 / math.pi)


def _gelu_tanh(x):
    # Matches the PyTorch tanh-approximation GELU module (kept in f32: tanh on EUP).
    return 0.5 * x * (1.0 + jnp.tanh(_GELU_C * (x + 0.044715 * x * x * x)))


# ---------------------------------------------------------------------------
# Kernels
# ---------------------------------------------------------------------------

def _ffn_kernel_single(x_ref, w1_ref, b1_ref, w2_ref, b2_ref, o_ref):
    # Whole hidden dim in one panel: no accumulator scratch, weights VMEM-resident
    # (constant index maps -> fetched once across the M grid).
    h = jnp.dot(x_ref[...], w1_ref[...], preferred_element_type=jnp.float32)
    h = _gelu_tanh(h + b1_ref[...])                       # b1 kept in f32
    out = jnp.dot(h.astype(w2_ref.dtype), w2_ref[...],
                  preferred_element_type=jnp.float32)
    o_ref[...] = (out + b2_ref[...]).astype(o_ref.dtype)


def _ffn_kernel_acc(x_ref, w1_ref, b1_ref, w2_ref, b2_ref, o_ref, acc_ref):
    # Hidden dim streamed in panels along grid axis 1 (reduction, "arbitrary").
    k = pl.program_id(1)

    @pl.when(k == 0)
    def _init():
        acc_ref[...] = jnp.zeros_like(acc_ref)

    h = jnp.dot(x_ref[...], w1_ref[...], preferred_element_type=jnp.float32)
    h = _gelu_tanh(h + b1_ref[...])                       # f32 elementwise (VPU/EUP)
    acc_ref[...] += jnp.dot(h.astype(w2_ref.dtype), w2_ref[...],
                            preferred_element_type=jnp.float32)

    @pl.when(k == pl.num_programs(1) - 1)
    def _finalize():
        o_ref[...] = (acc_ref[...] + b2_ref[...]).astype(o_ref.dtype)


# ---------------------------------------------------------------------------
# Tile / VMEM planning
# ---------------------------------------------------------------------------

def _round_up(v, m):
    return ((v + m - 1) // m) * m


def _cdiv(a, b):
    return -(-a // b)


def _vmem_budget_bytes():
    """~80% of the device's VMEM (falls back to the 64 MiB v7x floor)."""
    cap = 64 * 1024 * 1024
    try:
        info = pltpu.get_tpu_info()
        cap = int(getattr(info, "vmem_capacity_bytes", cap))
    except Exception:
        pass
    return int(cap * 0.80)


def _choose_tiles(m_p, e_p, h_full, bytes_x, bytes_w, bytes_out, budget):
    """Pick (tm, th) that fit `budget` of VMEM.

    Preference order:
      1. grid_k == 1 (weights fetched once) as long as tm is still MXU-sized,
      2. otherwise the largest tm (amortizes weight re-streaming), then largest th.
    256-multiples are preferred for the 256x256 MXUs; grid_m >= 2 is kept when
    M allows so the parallel axis can shard across v7x's two TensorCores.
    """
    def footprint(tm, th, grid_k):
        vmem = 2 * tm * e_p * bytes_x            # x (double-buffered)
        vmem += 2 * tm * e_p * bytes_out         # out
        vmem += 2 * e_p * th * bytes_w           # w1 panel
        vmem += 2 * th * e_p * bytes_w           # w2 panel
        vmem += 2 * 8 * th * 4                   # b1 (f32, sublane-padded)
        vmem += 2 * 8 * e_p * 4                  # b2 (f32)
        if grid_k > 1:
            vmem += tm * e_p * 4                 # f32 accumulator scratch
        return vmem

    tm_all = [t for t in (1024, 512, 256, 128, 64, 32, 16, 8) if t <= m_p]
    if not tm_all:
        tm_all = [max(8, m_p)]
    tm_cands = [t for t in tm_all if _cdiv(m_p, t) >= 2] or tm_all[-1:]

    th_cands = [h_full] + [t for t in (512, 256, 128) if t < h_full]

    best = None
    for th in th_cands:
        grid_k = _cdiv(h_full, th)
        for tm in tm_cands:                      # descending: first fit = largest
            if footprint(tm, th, grid_k) > budget:
                continue
            resident_ok = grid_k == 1 and (tm >= 256 or tm == tm_cands[0])
            score = (1 if resident_ok else 0, tm, th)
            if best is None or score > best[0]:
                best = (score, tm, th)
            break
    if best is None:
        return tm_all[-1], min(128, h_full)
    return best[1], best[2]


# ---------------------------------------------------------------------------
# Wrapper
# ---------------------------------------------------------------------------

def feedforward(x, w1, b1, w2, b2, *, compute_dtype=None,
                vmem_budget_bytes=None, tile_hidden=None):
    """x: (batch, seq, emb). w1: (emb, hidden), b1: (hidden,), w2: (hidden, emb),
    b2: (emb,).  Weights are stored (in_features, out_features), i.e. the
    transpose of nn.Linear, so the kernel computes x @ W + b directly.

    compute_dtype: optional MXU operand dtype (e.g. jnp.bfloat16) -- f32
    accumulation, f32 GELU and f32 biases are kept, so accuracy stays high while
    MXU throughput / weight HBM traffic improve 2-4x.  For repeated calls, pass
    already-padded / already-cast weights and the pads/casts below are skipped.
    """
    batch, seq, emb = x.shape
    hidden = w1.shape[1]
    m = batch * seq

    out_dtype = x.dtype
    mxu_dtype = jnp.dtype(compute_dtype) if compute_dtype is not None else x.dtype

    budget = int(vmem_budget_bytes) if vmem_budget_bytes is not None else _vmem_budget_bytes()

    e_p = _round_up(emb, 128)
    h_full = _round_up(hidden, 128)
    m_p = _round_up(m, 8)

    bytes_x = jnp.dtype(mxu_dtype).itemsize
    bytes_out = jnp.dtype(out_dtype).itemsize

    tm, th = _choose_tiles(m_p, e_p, h_full, bytes_x, bytes_x, bytes_out, budget)
    if tile_hidden is not None:
        th = min(_round_up(tile_hidden, 128), h_full)

    # Pad the problem up to exact tile multiples (zero padding is exact for this
    # FFN); avoids the "one giant tile" fallback and keeps every grid axis >= 1.
    m_pad = _round_up(m, tm)
    h_pad = _round_up(hidden, th)
    grid_m = m_pad // tm
    grid_k = h_pad // th

    def _prep(a, rows_to, cols_to, dt):
        if a.dtype != dt:
            a = a.astype(dt)
        pr, pc = rows_to - a.shape[0], cols_to - a.shape[1]
        if pr or pc:
            a = jnp.pad(a, ((0, pr), (0, pc)))
        return a

    x2d = _prep(x.reshape(m, emb), m_pad, e_p, mxu_dtype)
    w1p = _prep(w1, e_p, h_pad, mxu_dtype)
    w2p = _prep(w2, h_pad, e_p, mxu_dtype)
    b1p = _prep(b1.reshape(1, hidden), 1, h_pad, jnp.float32)   # biases stay f32
    b2p = _prep(b2.reshape(1, emb), 1, e_p, jnp.float32)

    if grid_k == 1:
        out2d = pl.pallas_call(
            _ffn_kernel_single,
            out_shape=jax.ShapeDtypeStruct((m_pad, e_p), out_dtype),
            grid_spec=pltpu.PrefetchScalarGridSpec(
                num_scalar_prefetch=0,
                grid=(grid_m,),
                in_specs=[
                    pl.BlockSpec((tm, e_p), lambda i: (i, 0)),      # x tile
                    pl.BlockSpec((e_p, h_pad), lambda i: (0, 0)),   # w1 (fetched once)
                    pl.BlockSpec((1, h_pad), lambda i: (0, 0)),     # b1
                    pl.BlockSpec((h_pad, e_p), lambda i: (0, 0)),   # w2 (fetched once)
                    pl.BlockSpec((1, e_p), lambda i: (0, 0)),       # b2
                ],
                out_specs=pl.BlockSpec((tm, e_p), lambda i: (i, 0)),
            ),
            compiler_params=pltpu.CompilerParams(
                dimension_semantics=("parallel",),
                vmem_limit_bytes=budget),
        )(x2d, w1p, b1p, w2p, b2p)
    else:
        out2d = pl.pallas_call(
            _ffn_kernel_acc,
            out_shape=jax.ShapeDtypeStruct((m_pad, e_p), out_dtype),
            grid_spec=pltpu.PrefetchScalarGridSpec(
                num_scalar_prefetch=0,
                grid=(grid_m, grid_k),
                in_specs=[
                    pl.BlockSpec((tm, e_p), lambda i, k: (i, 0)),   # x tile
                    pl.BlockSpec((e_p, th), lambda i, k: (0, k)),   # w1 column panel
                    pl.BlockSpec((1, th), lambda i, k: (0, k)),     # b1 slice
                    pl.BlockSpec((th, e_p), lambda i, k: (k, 0)),   # w2 row panel
                    pl.BlockSpec((1, e_p), lambda i, k: (0, 0)),    # b2 (VMEM-resident)
                ],
                out_specs=pl.BlockSpec((tm, e_p), lambda i, k: (i, 0)),  # resident over k
                scratch_shapes=[pltpu.VMEM((tm, e_p), jnp.float32)],
            ),
            compiler_params=pltpu.CompilerParams(
                dimension_semantics=("parallel", "arbitrary"),
                vmem_limit_bytes=budget),
        )(x2d, w1p, b1p, w2p, b2p)

    return out2d[:m, :emb].reshape(batch, seq, emb)


# ---------------------------------------------------------------------------
# Reference / test harness
# ---------------------------------------------------------------------------

def _init_params(key, emb_dim):
    """Deterministic init mirroring nn.Linear shapes (stored transposed)."""
    hidden = 4 * emb_dim
    k1, k2, k3, k4 = jax.random.split(key, 4)
    lim1 = 1.0 / math.sqrt(emb_dim)
    lim2 = 1.0 / math.sqrt(hidden)
    w1 = jax.random.uniform(k1, (emb_dim, hidden), jnp.float32, -lim1, lim1)
    b1 = jax.random.uniform(k2, (hidden,), jnp.float32, -lim1, lim1)
    w2 = jax.random.uniform(k3, (hidden, emb_dim), jnp.float32, -lim2, lim2)
    b2 = jax.random.uniform(k4, (emb_dim,), jnp.float32, -lim2, lim2)
    return w1, b1, w2, b2


def _reference(x, w1, b1, w2, b2):
    h = jnp.einsum("bse,eh->bsh", x, w1) + b1
    h = _gelu_tanh(h)
    return jnp.einsum("bsh,he->bse", h, w2) + b2


if __name__ == "__main__":
    root = jax.random.PRNGKey(0)
    kx, kp, kx2, kp2 = jax.random.split(root, 4)

    # Config 1: small module shapes, native f32 MXU path (single-panel kernel).
    batch, seq, emb_dim = 2, 8, 32
    x = jax.random.normal(kx, (batch, seq, emb_dim), jnp.float32)
    w1, b1, w2, b2 = _init_params(kp, emb_dim)

    out = jax.block_until_ready(feedforward(x, w1, b1, w2, b2))
    ref = _reference(x, w1, b1, w2, b2)
    assert out.shape == (batch, seq, emb_dim)
    assert jnp.allclose(out, ref, atol=1e-4, rtol=1e-4)

    # Config 2: same problem through the bf16-MXU fast path (f32 accumulate).
    out_bf16 = jax.block_until_ready(
        feedforward(x, w1, b1, w2, b2, compute_dtype=jnp.bfloat16))
    assert jnp.allclose(out_bf16, ref, atol=8e-2, rtol=8e-2)

    # Config 3: force a multi-step hidden reduction (accumulator kernel path).
    emb2 = 64
    x2 = jax.random.normal(kx2, (batch, seq, emb2), jnp.float32)
    p2 = _init_params(kp2, emb2)
    out2 = jax.block_until_ready(feedforward(x2, *p2, tile_hidden=128))
    ref2 = _reference(x2, *p2)
    assert jnp.allclose(out2, ref2, atol=1e-4, rtol=1e-4)

    print("KERNEL_OK")
</pallas_src>

<mosaic_0001>
module attributes {stable_mosaic.version = 11 : i64} {
  func.func @_ffn_kernel_single(%arg0: i32, %arg1: memref<8x128xf32, #tpu.memory_space<vmem>>, %arg2: memref<128x128xf32, #tpu.memory_space<vmem>>, %arg3: memref<1x128xf32, #tpu.memory_space<vmem>>, %arg4: memref<128x128xf32, #tpu.memory_space<vmem>>, %arg5: memref<1x128xf32, #tpu.memory_space<vmem>>, %arg6: memref<8x128xf32, #tpu.memory_space<vmem>>) attributes {dimension_semantics = [#tpu.dimension_semantics<parallel>], iteration_bounds = array<i64: 2>, scalar_prefetch = 0 : i64, scratch_operands = 0 : i64, tpu.core_type = #tpu.core_type<tc>, window_params = [{transform_indices = @transform_0, window_bounds = array<i64: 8, 128>}, {pipeline_mode = #tpu.pipeline_mode<synchronous>, transform_indices = @transform_1, window_bounds = array<i64: 128, 128>}, {pipeline_mode = #tpu.pipeline_mode<synchronous>, transform_indices = @transform_2, window_bounds = array<i64: 1, 128>}, {pipeline_mode = #tpu.pipeline_mode<synchronous>, transform_indices = @transform_3, window_bounds = array<i64: 128, 128>}, {pipeline_mode = #tpu.pipeline_mode<synchronous>, transform_indices = @transform_4, window_bounds = array<i64: 1, 128>}, {transform_indices = @transform_5, window_bounds = array<i64: 8, 128>}]} {
    %c0 = arith.constant 0 : index
    %c0_0 = arith.constant 0 : index
    %0 = vector.load %arg1[%c0, %c0_0] : memref<8x128xf32, #tpu.memory_space<vmem>>, vector<8x128xf32>
    %c0_1 = arith.constant 0 : index
    %c0_2 = arith.constant 0 : index
    %1 = vector.load %arg2[%c0_1, %c0_2] : memref<128x128xf32, #tpu.memory_space<vmem>>, vector<128x128xf32>
    %cst = arith.constant dense<0.000000e+00> : vector<8x128xf32>
    %2 = tpu.matmul %0, %1, %cst {dimension_numbers = #tpu.dot_dimension_numbers<[1], [0], [0], [1], [0, 0, 1, 1], [], []>} : vector<8x128xf32>, vector<128x128xf32>, vector<8x128xf32> -> vector<8x128xf32>
    %c0_3 = arith.constant 0 : index
    %c0_4 = arith.constant 0 : index
    %3 = vector.load %arg3[%c0_3, %c0_4] : memref<1x128xf32, #tpu.memory_space<vmem>>, vector<1x128xf32>
    %4 = vector.broadcast %3 : vector<1x128xf32> to vector<8x128xf32>
    %5 = arith.addf %2, %4 : vector<8x128xf32>
    %cst_5 = arith.constant 5.000000e-01 : f32
    %6 = vector.broadcast %cst_5 : f32 to vector<8x128xf32>
    %7 = arith.mulf %6, %5 : vector<8x128xf32>
    %cst_6 = arith.constant 4.471500e-02 : f32
    %8 = vector.broadcast %cst_6 : f32 to vector<8x128xf32>
    %9 = arith.mulf %8, %5 : vector<8x128xf32>
    %10 = arith.mulf %9, %5 : vector<8x128xf32>
    %11 = arith.mulf %10, %5 : vector<8x128xf32>
    %12 = arith.addf %5, %11 : vector<8x128xf32>
    %cst_7 = arith.constant 0.797884583 : f32
    %13 = vector.broadcast %cst_7 : f32 to vector<8x128xf32>
    %14 = arith.mulf %13, %12 : vector<8x128xf32>
    %15 = math.tanh %14 : vector<8x128xf32>
    %cst_8 = arith.constant 1.000000e+00 : f32
    %16 = vector.broadcast %cst_8 : f32 to vector<8x128xf32>
    %17 = arith.addf %16, %15 : vector<8x128xf32>
    %18 = arith.mulf %7, %17 : vector<8x128xf32>
    %c0_9 = arith.constant 0 : index
    %c0_10 = arith.constant 0 : index
    %19 = vector.load %arg4[%c0_9, %c0_10] : memref<128x128xf32, #tpu.memory_space<vmem>>, vector<128x128xf32>
    %cst_11 = arith.constant dense<0.000000e+00> : vector<8x128xf32>
    %20 = tpu.matmul %18, %19, %cst_11 {dimension_numbers = #tpu.dot_dimension_numbers<[1], [0], [0], [1], [0, 0, 1, 1], [], []>} : vector<8x128xf32>, vector<128x128xf32>, vector<8x128xf32> -> vector<8x128xf32>
    %c0_12 = arith.constant 0 : index
    %c0_13 = arith.constant 0 : index
    %21 = vector.load %arg5[%c0_12, %c0_13] : memref<1x128xf32, #tpu.memory_space<vmem>>, vector<1x128xf32>
    %22 = vector.broadcast %21 : vector<1x128xf32> to vector<8x128xf32>
    %23 = arith.addf %20, %22 : vector<8x128xf32>
    %c0_14 = arith.constant 0 : index
    %c0_15 = arith.constant 0 : index
    %24 = vector.load %arg6[%c0_14, %c0_15] : memref<8x128xf32, #tpu.memory_space<vmem>>, vector<8x128xf32>
    tpu.vector_store %arg6[%c0_14, %c0_15], %23 {strides = array<i32>} : memref<8x128xf32, #tpu.memory_space<vmem>>, vector<8x128xf32>,
    return
  }
  func.func @transform_0(%arg0: i32) -> (i32, i32) {
    %c0_i32 = arith.constant 0 : i32
    %c0_i32_0 = arith.constant 0 : i32
    return %arg0, %c0_i32 : i32, i32
  }
  func.func @transform_1(%arg0: i32) -> (i32, i32) {
    %c0_i32 = arith.constant 0 : i32
    %c0_i32_0 = arith.constant 0 : i32
    %c0_i32_1 = arith.constant 0 : i32
    return %c0_i32, %c0_i32_0 : i32, i32
  }
  func.func @transform_2(%arg0: i32) -> (i32, i32) {
    %c0_i32 = arith.constant 0 : i32
    %c0_i32_0 = arith.constant 0 : i32
    %c0_i32_1 = arith.constant 0 : i32
    return %c0_i32, %c0_i32_0 : i32, i32
  }
  func.func @transform_3(%arg0: i32) -> (i32, i32) {
    %c0_i32 = arith.constant 0 : i32
    %c0_i32_0 = arith.constant 0 : i32
    %c0_i32_1 = arith.constant 0 : i32
    return %c0_i32, %c0_i32_0 : i32, i32
  }
  func.func @transform_4(%arg0: i32) -> (i32, i32) {
    %c0_i32 = arith.constant 0 : i32
    %c0_i32_0 = arith.constant 0 : i32
    %c0_i32_1 = arith.constant 0 : i32
    return %c0_i32, %c0_i32_0 : i32, i32
  }
  func.func @transform_5(%arg0: i32) -> (i32, i32) {
    %c0_i32 = arith.constant 0 : i32
    %c0_i32_0 = arith.constant 0 : i32
    return %arg0, %c0_i32 : i32, i32
  }
}

</mosaic_0001>

<llo_original>
// kernel: tpu_custom_call.1
$region0: #{tpu_custom_call.1}
  #allocation0 [shape = 'u32[]', space=smem, size = 0x4, offset = 0x4, fixed_abs, tag = 'smem constant byte address 0x4 - core index']
  #allocation1 [shape = 'u32[72,128]{1,0:T(1,128)}', space=vmem, size = 0x9000, scoped, tag = 'internal scratch']
  %s0 = inlined_call_operand.hbm [shape: f32[16,128], index: 0, kind: input, shape index: {}]
  %s1 = inlined_call_operand.hbm [shape: f32[128,128], index: 1, kind: input, shape index: {}]
  %s2 = inlined_call_operand.vmem [shape: f32[1,128], index: 2, kind: input, shape index: {}]
  %s3 = inlined_call_operand.hbm [shape: f32[128,128], index: 3, kind: input, shape index: {}]
  %s4 = inlined_call_operand.vmem [shape: f32[1,128], index: 4, kind: input, shape index: {}]
  %s5 = inlined_call_operand.hbm [shape: f32[16,128], index: 5, kind: output, shape index: {}]
  %s6 = sld [smem:[#allocation0]]
  $region65: #{tpu_custom_call.1} parent=0
    _
  %s8 = ssub.s32 1, %s6
  %s9 = scalar_select 0, %s8, %s6
  $region1: #{tpu_custom_call.1} parent=0
    #allocation2 [shape = 'u8[8192]{0}', space=vmem, size = 0x2000, scoped, tag = 'input window, operand 0']
    #allocation3 [shape = 's32[2]{0}', space=sflag, size = 0x8, scoped, tag = 'scoped memory for tpu_custom_call.1']
    #allocation4 [shape = 's32[2]{0}', space=sflag, size = 0x8, scoped, tag = 'scoped memory for tpu_custom_call.1']
    #allocation5 [shape = 'u8[65536]{0}', space=vmem, size = 0x10000, scoped, tag = 'input window, operand 1, single buffered']
    #allocation6 [shape = 's32[1]{0}', space=sflag, size = 0x4, scoped, tag = 'scoped memory for tpu_custom_call.1']
    #allocation7 [shape = 'u8[65536]{0}', space=vmem, size = 0x10000, scoped, tag = 'input window, operand 3, single buffered']
    #allocation8 [shape = 'u8[8192]{0}', space=vmem, size = 0x2000, scoped, tag = 'output window, operand 0']
    %10 = vsyncpa [#allocation3], 0
    %s11 = scalar_lea.sflag [#allocation3], 1
    %12 = vsyncpa %s11, 0
    %13 = vsyncpa [#allocation6], 0
    %14 = vsyncpa [#allocation4], 0
    %s15 = scalar_lea.sflag [#allocation4], 1
    %16 = vsyncpa %s15, 0
    loop: start=0, step=1, limit=4
    $region2: #{tpu_custom_call.1} parent=1 // loop_pre_header
      _
    $region3: #{tpu_custom_call.1} parent=1 // loop_header
      %s18 = sphi 0, %s22
      %p19 = scmp.ge.s32.totalorder %s18, 4
      %s28 = sphi 0, %s30
      %s31 = sphi 0, %s28
      %s32 = sphi 0, %s31
      %s48 = sphi 0, %s32
      %s52 = sphi 0, %s52
      %s54 = sphi 0, %s52
      %s55 = sphi 0, %s54
      %s69 = sphi 0, %s55
      %s73 = sphi 0, %s73
      %s75 = sphi 0, %s73
      %s76 = sphi 0, %s75
      %s90 = sphi 0, %s76
      %s94 = sphi 0, %s94
      %s96 = sphi 0, %s94
      %s97 = sphi 0, %s96
      %s111 = sphi 0, %s97
      %s115 = sphi 0, %s115
      %s117 = sphi 0, %s115
      %s118 = sphi 0, %s117
      %s132 = sphi 0, %s118
      %s138 = sphi 0, %s140
      %s141 = sphi 0, %s138
      %s142 = sphi 0, %s141
      %s158 = sphi 0, %s142
    $region4: #{tpu_custom_call.1} parent=1 // loop_header_branch
      %21 = sbr.rel (%p19) target = $region8
    $region5: #{tpu_custom_call.1} parent=1 // loop_body
      %s23 = ssub.s32 %s18, 1
      %s24 = ssub.s32 %s18, 2
      %s25 = sadd.s32 %s18, 1
      %s26 = ssub.s32 %s18, %s25
      %p27 = scmp.eq.s32.totalorder %s26, 0
      %s29 = sadd.s32 %s28, 1
      %s30 = scalar_select %p27, %s28, %s29
      %p33 = pneg %p27
      %p34 = scmp.eq.s32.totalorder %s18, 1
      %p35 = por %p33, %p34
      %p36 = scmp.ne.s32.totalorder %s28, %s31
      %p37 = scmp.eq.s32.totalorder %s18, 0
      %p38 = por %p36, %p37
      %p39 = scmp.ne.s32.totalorder %s28, %s31
      %p40 = scmp.eq.s32.totalorder %s23, 1
      %p41 = por %p39, %p40
      %p42 = scmp.ne.s32.totalorder %s31, %s32
      %p43 = scmp.eq.s32.totalorder %s23, 0
      %p44 = por %p42, %p43
      %p45 = scmp.ne.s32.totalorder %s31, %s32
      %p46 = scmp.eq.s32.totalorder %s24, 1
      %p47 = por %p45, %p46
      %p49 = scmp.ne.s32.totalorder %s32, %s48
      %p50 = scmp.eq.s32.totalorder %s24, 0
      %p51 = por %p49, %p50
      %s53 = sadd.s32 %s52, 1
      %p56 = scmp.eq.s32.totalorder %s18, 1
      %p57 = scmp.ne.s32.totalorder %s52, %s54
      %p58 = scmp.eq.s32.totalorder %s18, 0
      %p59 = por %p57, %p58
      %p60 = scmp.ne.s32.totalorder %s52, %s54
      %p61 = scmp.eq.s32.totalorder %s23, 1
      %p62 = por %p60, %p61
      %p63 = scmp.ne.s32.totalorder %s54, %s55
      %p64 = scmp.eq.s32.totalorder %s23, 0
      %p65 = por %p63, %p64
      %p66 = scmp.ne.s32.totalorder %s54, %s55
      %p67 = scmp.eq.s32.totalorder %s24, 1
      %p68 = por %p66, %p67
      %p70 = scmp.ne.s32.totalorder %s55, %s69
      %p71 = scmp.eq.s32.totalorder %s24, 0
      %p72 = por %p70, %p71
      %s74 = sadd.s32 %s73, 1
      %p77 = scmp.eq.s32.totalorder %s18, 1
      %p78 = scmp.ne.s32.totalorder %s73, %s75
      %p79 = scmp.eq.s32.totalorder %s18, 0
      %p80 = por %p78, %p79
      %p81 = scmp.ne.s32.totalorder %s73, %s75
      %p82 = scmp.eq.s32.totalorder %s23, 1
      %p83 = por %p81, %p82
      %p84 = scmp.ne.s32.totalorder %s75, %s76
      %p85 = scmp.eq.s32.totalorder %s23, 0
      %p86 = por %p84, %p85
      %p87 = scmp.ne.s32.totalorder %s75, %s76
      %p88 = scmp.eq.s32.totalorder %s24, 1
      %p89 = por %p87, %p88
      %p91 = scmp.ne.s32.totalorder %s76, %s90
      %p92 = scmp.eq.s32.totalorder %s24, 0
      %p93 = por %p91, %p92
      %s95 = sadd.s32 %s94, 1
      %p98 = scmp.eq.s32.totalorder %s18, 1
      %p99 = scmp.ne.s32.totalorder %s94, %s96
      %p100 = scmp.eq.s32.totalorder %s18, 0
      %p101 = por %p99, %p100
      %p102 = scmp.ne.s32.totalorder %s94, %s96
      %p103 = scmp.eq.s32.totalorder %s23, 1
      %p104 = por %p102, %p103
      %p105 = scmp.ne.s32.totalorder %s96, %s97
      %p106 = scmp.eq.s32.totalorder %s23, 0
      %p107 = por %p105, %p106
      %p108 = scmp.ne.s32.totalorder %s96, %s97
      %p109 = scmp.eq.s32.totalorder %s24, 1
      %p110 = por %p108, %p109
      %p112 = scmp.ne.s32.totalorder %s97, %s111
      %p113 = scmp.eq.s32.totalorder %s24, 0
      %p114 = por %p112, %p113
      %s116 = sadd.s32 %s115, 1
      %p119 = scmp.eq.s32.totalorder %s18, 1
      %p120 = scmp.ne.s32.totalorder %s115, %s117
      %p121 = scmp.eq.s32.totalorder %s18, 0
      %p122 = por %p120, %p121
      %p123 = scmp.ne.s32.totalorder %s115, %s117
      %p124 = scmp.eq.s32.totalorder %s23, 1
      %p125 = por %p123, %p124
      %p126 = scmp.ne.s32.totalorder %s117, %s118
      %p127 = scmp.eq.s32.totalorder %s23, 0
      %p128 = por %p126, %p127
      %p129 = scmp.ne.s32.totalorder %s117, %s118
      %p130 = scmp.eq.s32.totalorder %s24, 1
      %p131 = por %p129, %p130
      %p133 = scmp.ne.s32.totalorder %s118, %s132
      %p134 = scmp.eq.s32.totalorder %s24, 0
      %p135 = por %p133, %p134
      %s136 = ssub.s32 %s18, %s25
      %p137 = scmp.eq.s32.totalorder %s136, 0
      %s139 = sadd.s32 %s138, 1
      %s140 = scalar_select %p137, %s138, %s139
      %p143 = pneg %p137
      %p144 = scmp.eq.s32.totalorder %s18, 1
      %p145 = por %p143, %p144
      %p146 = scmp.ne.s32.totalorder %s138, %s141
      %p147 = scmp.eq.s32.totalorder %s18, 0
      %p148 = por %p146, %p147
      %p149 = scmp.ne.s32.totalorder %s138, %s141
      %p150 = scmp.eq.s32.totalorder %s23, 1
      %p151 = por %p149, %p150
      %p152 = scmp.ne.s32.totalorder %s141, %s142
      %p153 = scmp.eq.s32.totalorder %s23, 0
      %p154 = por %p152, %p153
      %p155 = scmp.ne.s32.totalorder %s141, %s142
      %p156 = scmp.eq.s32.totalorder %s24, 1
      %p157 = por %p155, %p156
      %p159 = scmp.ne.s32.totalorder %s142, %s158
      %p160 = scmp.eq.s32.totalorder %s24, 0
      %p161 = por %p159, %p160
      %p162 = scmp.le.s32.totalorder 1, %s18
      %p163 = scmp.lt.s32.totalorder %s18, 3
      %p164 = pnand %p162, %p163
      %p165 = pneg %p164
      // Predicated region
      $region9: #{tpu_custom_call.1} parent=5 // pred_check
        _
      $region10: #{tpu_custom_call.1} parent=5 // pred_check_branch
        %167 = sbr.rel (%p164) target = $region12
      $region11: #{tpu_custom_call.1} parent=5 // pred_region
        %s168 = ssub.s32 %s18, 1
        // Predicated region
        $region13: #{tpu_custom_call.1} parent=11 // pred_check
          %p169 = pneg %p65
        $region14: #{tpu_custom_call.1} parent=11 // pred_check_branch
          %171 = sbr.rel (%p169) target = $region16
        $region15: #{tpu_custom_call.1} parent=11 // pred_region
          %173 = vsyncadd [#allocation6], 0
          %s174 = sshll.u32 %s1, 4
          %s175 = int_to_ptr.hbm [resolvable:$true] %s174
          %s176 = sshll.u32 [#allocation5], 4
          %s177 = int_to_ptr.vmem [resolvable:$true] %s176
          %182 = dma.hbm_to_vmem [thread:$0]  %s175, 2048, %s177, [#allocation6], 128, 128, 8
        $region16: #{tpu_custom_call.1} parent=11 // pred_fallthru
          _
        // Predicated region
        $region17: #{tpu_custom_call.1} parent=11 // pred_check
          %p183 = pneg %p86
        $region18: #{tpu_custom_call.1} parent=11 // pred_check_branch
          %185 = sbr.rel (%p183) target = $region20
        $region19: #{tpu_custom_call.1} parent=11 // pred_region
          _
        $region20: #{tpu_custom_call.1} parent=11 // pred_fallthru
          _
        // Predicated region
        $region21: #{tpu_custom_call.1} parent=11 // pred_check
          %p186 = pneg %p107
        $region22: #{tpu_custom_call.1} parent=11 // pred_check_branch
          %188 = sbr.rel (%p186) target = $region24
        $region23: #{tpu_custom_call.1} parent=11 // pred_region
          %190 = vsyncadd [#allocation6], 0
          %s191 = sshll.u32 %s3, 4
          %s192 = int_to_ptr.hbm [resolvable:$true] %s191
          %s193 = sshll.u32 [#allocation7], 4
          %s194 = int_to_ptr.vmem [resolvable:$true] %s193
          %199 = dma.hbm_to_vmem [thread:$0]  %s192, 2048, %s194, [#allocation6], 128, 128, 8
        $region24: #{tpu_custom_call.1} parent=11 // pred_fallthru
          _
        // Predicated region
        $region25: #{tpu_custom_call.1} parent=11 // pred_check
          %p200 = pneg %p128
        $region26: #{tpu_custom_call.1} parent=11 // pred_check_branch
          %202 = sbr.rel (%p200) target = $region28
        $region27: #{tpu_custom_call.1} parent=11 // pred_region
          _
        $region28: #{tpu_custom_call.1} parent=11 // pred_fallthru
          _
      $region12: #{tpu_custom_call.1} parent=5 // pred_fallthru
        _
      %p203 = scmp.lt.s32.totalorder %s18, 2
      // Predicated region
      $region29: #{tpu_custom_call.1} parent=5 // pred_check
        %p204 = pneg %p203
      $region30: #{tpu_custom_call.1} parent=5 // pred_check_branch
        %206 = sbr.rel (%p204) target = $region32
      $region31: #{tpu_custom_call.1} parent=5 // pred_region
        // Predicated region
        $region33: #{tpu_custom_call.1} parent=31 // pred_check
          %p207 = pneg %p38
        $region34: #{tpu_custom_call.1} parent=31 // pred_check_branch
          %209 = sbr.rel (%p207) target = $region36
        $region35: #{tpu_custom_call.1} parent=31 // pred_region
          %s210 = sand.u32 %s28, 1
          %s211 = scalar_lea.sflag [#allocation3], %s210
          %s212 = sand.u32 %s28, 1
          %s213 = smul.addr %s212, 8
          %s214 = scalar_lea.vmem [#allocation2], %s213
          %216 = vsyncadd %s211, 0
          %s217 = smul.addr %s18, 8
          %s218 = scalar_lea.hbm %s0, %s217
          %s220 = sshll.u32 %s218, 4
          %s221 = int_to_ptr.hbm [resolvable:$true] %s220
          %s222 = sshll.u32 %s214, 4
          %s223 = int_to_ptr.vmem [resolvable:$true] %s222
          %225 = dma.hbm_to_vmem [thread:$0]  %s221, 128, %s223, %s211
        $region36: #{tpu_custom_call.1} parent=31 // pred_fallthru
          _
      $region32: #{tpu_custom_call.1} parent=5 // pred_fallthru
        _
      %p226 = scmp.le.s32.totalorder 1, %s18
      %p227 = scmp.lt.s32.totalorder %s18, 3
      %p228 = pnand %p226, %p227
      %p229 = pneg %p228
      // Predicated region
      $region37: #{tpu_custom_call.1} parent=5 // pred_check
        _
      $region38: #{tpu_custom_call.1} parent=5 // pred_check_branch
        %231 = sbr.rel (%p228) target = $region40
      $region39: #{tpu_custom_call.1} parent=5 // pred_region
        %s232 = ssub.s32 %s18, 1
        %s233 = sand.u32 %s31, 1
        %s234 = scalar_lea.sflag [#allocation3], %s233
        %s235 = sand.u32 %s31, 1
        %s236 = smul.addr %s235, 8
        %s237 = scalar_lea.vmem [#allocation2], %s236
        // Predicated region
        $region41: #{tpu_custom_call.1} parent=39 // pred_check
          %p238 = pneg %p44
        $region42: #{tpu_custom_call.1} parent=39 // pred_check_branch
          %240 = sbr.rel (%p238) target = $region44
        $region43: #{tpu_custom_call.1} parent=39 // pred_region
          %242 = dma.done %s234, 128
        $region44: #{tpu_custom_call.1} parent=39 // pred_fallthru
          _
        // Predicated region
        $region45: #{tpu_custom_call.1} parent=39 // pred_check
          %p243 = pneg %p65
        $region46: #{tpu_custom_call.1} parent=39 // pred_check_branch
          %245 = sbr.rel (%p243) target = $region48
        $region47: #{tpu_custom_call.1} parent=39 // pred_region
          %247 = dma.done [#allocation6], 2048
        $region48: #{tpu_custom_call.1} parent=39 // pred_fallthru
          _
        // Predicated region
        $region49: #{tpu_custom_call.1} parent=39 // pred_check
          %p248 = pneg %p107
        $region50: #{tpu_custom_call.1} parent=39 // pred_check_branch
          %250 = sbr.rel (%p248) target = $region52
        $region51: #{tpu_custom_call.1} parent=39 // pred_region
          %252 = dma.done [#allocation6], 2048
        $region52: #{tpu_custom_call.1} parent=39 // pred_fallthru
          _
        %s253 = sand.u32 %s31, 1
        %s254 = scalar_lea.sflag [#allocation3], %s253
        %s255 = sand.u32 %s31, 1
        %s256 = smul.addr %s255, 8
        %s257 = scalar_lea.vmem [#allocation2], %s256
        %p258 = pneg %p44
        %p259 = pneg %p41
        %p260 = pneg %p65
        %p261 = pneg %p62
        %p262 = pneg %p86
        %p263 = pneg %p83
        %p264 = pneg %p107
        %p265 = pneg %p104
        %p266 = pneg %p128
        %p267 = pneg %p125
        %p268 = pneg %p154
        %p269 = pneg %p151
        %s270 = sand.u32 %s141, 1
        %s271 = scalar_lea.sflag [#allocation4], %s270
        %s272 = sand.u32 %s141, 1
        %s273 = smul.addr %s272, 8
        %s274 = scalar_lea.vmem [#allocation8], %s273
        %v275 = vld [vmem:[%s237] sm:$0xff]
        %v276 = vld [vmem:[#allocation5] sm:$0xff]
        %v277 = vld [vmem:[#allocation5 + $0x8] sm:$0xff]
        %v278 = vld [vmem:[#allocation5 + $0x10] sm:$0xff]
        %v279 = vld [vmem:[#allocation5 + $0x18] sm:$0xff]
        %v280 = vld [vmem:[#allocation5 + $0x20] sm:$0xff]
        %v281 = vld [vmem:[#allocation5 + $0x28] sm:$0xff]
        %v282 = vld [vmem:[#allocation5 + $0x30] sm:$0xff]
        %v283 = vld [vmem:[#allocation5 + $0x38] sm:$0xff]
        %v284 = vld [vmem:[#allocation5 + $0x40] sm:$0xff]
        %v285 = vld [vmem:[#allocation5 + $0x48] sm:$0xff]
        %v286 = vld [vmem:[#allocation5 + $0x50] sm:$0xff]
        %v287 = vld [vmem:[#allocation5 + $0x58] sm:$0xff]
        %v288 = vld [vmem:[#allocation5 + $0x60] sm:$0xff]
        %v289 = vld [vmem:[#allocation5 + $0x68] sm:$0xff]
        %v290 = vld [vmem:[#allocation5 + $0x70] sm:$0xff]
        %v291 = vld [vmem:[#allocation5 + $0x78] sm:$0xff]
        %v292 = vld [vmem:[%s2] sm:$0x1]
        %v294 = vperm.slane %v292, 0
        %296 = vmatpush.msra.mxu0 %v291
        %297 = vmatpush.msra.mxu0 %v290
        %298 = vmatpush.msra.mxu0 %v289
        %299 = vmatpush.msra.mxu0 %v288
        %300 = vmatpush.msra.mxu0 %v287
        %301 = vmatpush.msra.mxu0 %v286
        %302 = vmatpush.msra.mxu0 %v285
        %303 = vmatpush.msra.mxu0 %v284
        %304 = vmatpush.msra.mxu0 %v283
        %305 = vmatpush.msra.mxu0 %v282
        %306 = vmatpush.msra.mxu0 %v281
        %307 = vmatpush.msra.mxu0 %v280
        %308 = vmatpush.msra.mxu0 %v279
        %309 = vmatpush.msra.mxu0 %v278
        %310 = vmatpush.msra.mxu0 %v277
        %311 = vmatpush.msra.mxu0 %v276
        %312 = vmatmul.f32.gmra.mxu0 %v275
        %v313 = vpop.f32.mrf.mxu0
        %v314 = vadd.f32 %v294, %v313
        %315 = vdwg.mxu0
        %v316 = vmul.f32 %v314, 0.5
        %v317 = vmul.f32 %v314, 0.044715
        %v318 = vmul.f32 %v317, %v314
        %v319 = vmul.f32 %v318, %v314
        %v320 = vadd.f32 %v314, %v319
        %v321 = vmul.f32 %v320, 0.7978846
        %v322 = vtanh.pop %v321
        %v323 = vadd.f32 %v322, 1.0
        %v324 = vmul.f32 %v316, %v323
        %v325 = vld [vmem:[#allocation7] sm:$0xff]
        %v326 = vld [vmem:[#allocation7 + $0x8] sm:$0xff]
        %v327 = vld [vmem:[#allocation7 + $0x10] sm:$0xff]
        %v328 = vld [vmem:[#allocation7 + $0x18] sm:$0xff]
        %v329 = vld [vmem:[#allocation7 + $0x20] sm:$0xff]
        %v330 = vld [vmem:[#allocation7 + $0x28] sm:$0xff]
        %v331 = vld [vmem:[#allocation7 + $0x30] sm:$0xff]
        %v332 = vld [vmem:[#allocation7 + $0x38] sm:$0xff]
        %v333 = vld [vmem:[#allocation7 + $0x40] sm:$0xff]
        %v334 = vld [vmem:[#allocation7 + $0x48] sm:$0xff]
        %v335 = vld [vmem:[#allocation7 + $0x50] sm:$0xff]
        %v336 = vld [vmem:[#allocation7 + $0x58] sm:$0xff]
        %v337 = vld [vmem:[#allocation7 + $0x60] sm:$0xff]
        %v338 = vld [vmem:[#allocation7 + $0x68] sm:$0xff]
        %v339 = vld [vmem:[#allocation7 + $0x70] sm:$0xff]
        %v340 = vld [vmem:[#allocation7 + $0x78] sm:$0xff]
        %v341 = vld [vmem:[%s4] sm:$0x1]
        %v343 = vperm.slane %v341, 0
        %345 = vmatpush.msra.mxu0 %v340
        %346 = vmatpush.msra.mxu0 %v339
        %347 = vmatpush.msra.mxu0 %v338
        %348 = vmatpush.msra.mxu0 %v337
        %349 = vmatpush.msra.mxu0 %v336
        %350 = vmatpush.msra.mxu0 %v335
        %351 = vmatpush.msra.mxu0 %v334
        %352 = vmatpush.msra.mxu0 %v333
        %353 = vmatpush.msra.mxu0 %v332
        %354 = vmatpush.msra.mxu0 %v331
        %355 = vmatpush.msra.mxu0 %v330
        %356 = vmatpush.msra.mxu0 %v329
        %357 = vmatpush.msra.mxu0 %v328
        %358 = vmatpush.msra.mxu0 %v327
        %359 = vmatpush.msra.mxu0 %v326
        %360 = vmatpush.msra.mxu0 %v325
        %361 = vmatmul.f32.gmra.mxu0 %v324
        %v362 = vpop.f32.mrf.mxu0
        %v363 = vadd.f32 %v343, %v362
        %364 = vdwg.mxu0
        %365 = vst [vmem:[%s274] sm:$0xff] %v363
        %s366 = sand.u32 %s141, 1
        %s367 = scalar_lea.sflag [#allocation4], %s366
        %s368 = sand.u32 %s141, 1
        %s369 = smul.addr %s368, 8
        %s370 = scalar_lea.vmem [#allocation8], %s369
        // Predicated region
        $region53: #{tpu_custom_call.1} parent=39 // pred_check
          %p371 = pneg %p151
        $region54: #{tpu_custom_call.1} parent=39 // pred_check_branch
          %373 = sbr.rel (%p371) target = $region56
        $region55: #{tpu_custom_call.1} parent=39 // pred_region
          %375 = vsyncadd %s367, 0
          %s376 = smul.addr %s23, 8
          %s377 = scalar_lea.hbm %s5, %s376
          %s379 = sshll.u32 %s370, 4
          %s380 = int_to_ptr.vmem [resolvable:$true] %s379
          %s381 = sshll.u32 %s377, 4
          %s382 = int_to_ptr.hbm [resolvable:$true] %s381
          %384 = dma.vmem_to_hbm [thread:$0]  %s380, 128, %s382, %s367
        $region56: #{tpu_custom_call.1} parent=39 // pred_fallthru
          _
      $region40: #{tpu_custom_call.1} parent=5 // pred_fallthru
        _
      %p385 = scmp.le.s32.totalorder 2, %s18
      // Predicated region
      $region57: #{tpu_custom_call.1} parent=5 // pred_check
        %p386 = pneg %p385
      $region58: #{tpu_custom_call.1} parent=5 // pred_check_branch
        %388 = sbr.rel (%p386) target = $region60
      $region59: #{tpu_custom_call.1} parent=5 // pred_region
        %s389 = ssub.s32 %s18, 2
        // Predicated region
        $region61: #{tpu_custom_call.1} parent=59 // pred_check
          %p390 = pneg %p157
        $region62: #{tpu_custom_call.1} parent=59 // pred_check_branch
          %392 = sbr.rel (%p390) target = $region64
        $region63: #{tpu_custom_call.1} parent=59 // pred_region
          %s393 = sand.u32 %s142, 1
          %s394 = scalar_lea.sflag [#allocation4], %s393
          %s395 = sand.u32 %s142, 1
          %s396 = smul.addr %s395, 8
          %s397 = scalar_lea.vmem [#allocation8], %s396
          %399 = dma.done %s394, 128
        $region64: #{tpu_custom_call.1} parent=59 // pred_fallthru
          _
      $region60: #{tpu_custom_call.1} parent=5 // pred_fallthru
        _
    $region6: #{tpu_custom_call.1} parent=1 // loop_footer
      %s22 = sadd.s32 1, %s18
    $region7: #{tpu_custom_call.1} parent=1 // loop_footer_branch
      %17 = sbr.rel target = $region3
    $region8: #{tpu_custom_call.1} parent=1 // loop_exit
      _
    %400 = vsyncpa [#allocation3], 1
    %s401 = scalar_lea.sflag [#allocation3], 1
    %402 = vsyncpa %s401, 1
    %403 = vsyncpa [#allocation6], 1
    %404 = vsyncpa [#allocation4], 1
    %s405 = scalar_lea.sflag [#allocation4], 1
    %406 = vsyncpa %s405, 1

</llo_original>
